<compile_context>
chip_gen: v6e
topology: v6e:2x2x1
jax: 0.10.0
libtpu: 0.0.40
codegen_flags: <defaults>
</compile_context>

<pallas_src>
import jax
import jax.numpy as jnp
from jax.experimental import pallas as pl
from jax.experimental.pallas import tpu as pltpu


def _round_up(x, m):
    return (x + m - 1) // m * m


def _cdiv(a, b):
    return (a + b - 1) // b


# ----------------------------------------------------------------- kernels --

def _mylinear_kernel_scratch(x_ref, w_ref, b_ref, o_ref, acc_ref):
    """Non-f32 output (e.g. bf16): f32 accumulator lives in VMEM scratch."""
    k = pl.program_id(2)

    @pl.when(k == 0)
    def _init():
        acc_ref[...] = jnp.zeros_like(acc_ref)

    # MXU: bf16 x bf16 -> f32 accumulate.
    acc_ref[...] += jnp.dot(x_ref[...], w_ref[...],
                            preferred_element_type=jnp.float32)

    @pl.when(k == pl.num_programs(2) - 1)
    def _finalize():
        out = acc_ref[...] + b_ref[...]           # (1, tn) broadcasts over rows
        o_ref[...] = jnp.maximum(out, 0.0).astype(o_ref.dtype)


def _mylinear_kernel_f32out(x_ref, w_ref, b_ref, o_ref):
    """f32 output: accumulate directly into the resident output tile (no scratch)."""
    k = pl.program_id(2)

    @pl.when(k == 0)
    def _init():
        o_ref[...] = jnp.zeros_like(o_ref)

    o_ref[...] += jnp.dot(x_ref[...], w_ref[...],
                          preferred_element_type=jnp.float32)

    @pl.when(k == pl.num_programs(2) - 1)
    def _finalize():
        o_ref[...] = jnp.maximum(o_ref[...] + b_ref[...], 0.0)


# ------------------------------------------------------------ tile planning --

def _device_config():
    try:
        kind = jax.devices()[0].device_kind.lower()
    except Exception:
        kind = ""
    if "v6" in kind:
        # 918 TF/s MXU vs ~1.4 TB/s HBM: needs big tiles; 128 MiB physical VMEM.
        return dict(tm=1024, tn=1024, tk=1024, vmem=64 * 1024 * 1024, cores=1)
    if "v7" in kind:
        # 64 MiB VMEM/TC, 3.2 TB/s HBM, 2 TCs: moderate tiles, even parallel grid.
        return dict(tm=512, tn=512, tk=1024, vmem=48 * 1024 * 1024, cores=2)
    if "v5" in kind:
        # v5e crossover ~240 FLOP/byte: 512^2 already compute-bound.
        return dict(tm=512, tn=512, tk=1024, vmem=64 * 1024 * 1024, cores=1)
    return dict(tm=512, tn=512, tk=1024, vmem=48 * 1024 * 1024, cores=1)


def _pick_tile(size, preferred, align):
    """Largest ~evenly-splitting tile <= preferred, aligned to `align` (no
    near-whole-tile padding waste)."""
    size_aligned = _round_up(size, align)
    if size_aligned <= preferred:
        return size_aligned
    n_tiles = _cdiv(size_aligned, preferred)
    return _round_up(_cdiv(size_aligned, n_tiles), align)


def _vmem_bytes(tm, tn, tk, out_bytes, use_scratch):
    need = 2 * (tm * tk * 2)            # X tile, bf16, double-buffered
    need += 2 * (tk * tn * 2)           # W tile, bf16, double-buffered
    need += 2 * (tm * tn * out_bytes)   # output tile, double-buffered
    need += 2 * (tn * 4)                # bias slice
    if use_scratch:
        need += tm * tn * 4             # f32 accumulator scratch
    return need


def _shrink_to_fit(tm, tn, tk, out_bytes, use_scratch, limit):
    """Safety net; the device defaults fit comfortably on every generation."""
    while _vmem_bytes(tm, tn, tk, out_bytes, use_scratch) > int(0.85 * limit):
        if tk % 256 == 0:        # keep 128-lane alignment + Kp divisibility
            tk //= 2
        elif tn % 256 == 0:
            tn //= 2
        elif tm % 32 == 0:
            tm //= 2
        else:
            break
    return tm, tn, tk


def _even_parallel_grid(m, n_padded, tm, tn, cores):
    """On multi-TC chips (v7x) make grid_m * grid_n a multiple of `cores`."""
    if cores <= 1:
        return tm, tn
    gm, gn = _cdiv(m, tm), n_padded // tn
    if (gm * gn) % cores == 0:
        return tm, tn
    if tn % 256 == 0 and (gm * (n_padded // (tn // 2))) % cores == 0:
        return tm, tn // 2
    if tm % 32 == 0 and (_cdiv(m, tm // 2) * gn) % cores == 0:
        return tm // 2, tn
    return tm, tn


# -------------------------------------------------------------- module shim --

class MyLinearPallas:
    """ReLU(X @ W + b), matching the PyTorch MyLinear forward.

    Weight/bias are cast (bf16 / f32) and zero-padded to tile multiples once at
    construction; the forward only (optionally) pads X.  Output defaults to
    bf16 (fast path); pass out_dtype=jnp.float32 for an f32 output.
    """

    def __init__(self, weight, bias, *, out_dtype=jnp.bfloat16,
                 tm=None, tn=None, tk=None):
        K, N = weight.shape
        assert bias.shape == (N,), (bias.shape, N)
        cfg = _device_config()
        self._cores = cfg["cores"]
        self._vmem_limit = cfg["vmem"]
        self._out_dtype = jnp.dtype(out_dtype)
        self._pref_tm = tm if tm is not None else cfg["tm"]
        self._K, self._N = K, N

        self._tn = _pick_tile(N, tn if tn is not None else cfg["tn"], 128)
        self._tk = _pick_tile(K, tk if tk is not None else cfg["tk"], 128)
        self._Kp = _round_up(K, self._tk)
        self._Np = _round_up(N, self._tn)

        # One-time cast + pad of the static parameters.
        w = weight.astype(jnp.bfloat16)
        if (self._Kp, self._Np) != (K, N):
            w = jnp.zeros((self._Kp, self._Np), jnp.bfloat16).at[:K, :N].set(w)
        b = bias.astype(jnp.float32).reshape(1, N)
        if self._Np != N:
            b = jnp.zeros((1, self._Np), jnp.float32).at[:, :N].set(b)
        self._w, self._b = w, b

    def __call__(self, x):
        M, K = x.shape
        assert K == self._K, (K, self._K)
        out_dtype = self._out_dtype
        out_bytes = out_dtype.itemsize
        f32_out = out_dtype == jnp.float32

        tm = _pick_tile(M, self._pref_tm, 16)      # 16: bf16 sublane packing
        tn, tk = self._tn, self._tk
        tm, tn, tk = _shrink_to_fit(tm, tn, tk, out_bytes,
                                    use_scratch=not f32_out,
                                    limit=self._vmem_limit)
        tm, tn = _even_parallel_grid(M, self._Np, tm, tn, self._cores)

        Mp, Kp, Np = _round_up(M, tm), self._Kp, self._Np
        grid = (Mp // tm, Np // tn, Kp // tk)

        xp = x.astype(jnp.bfloat16)
        if (Mp, Kp) != (M, K):                     # fast path: skip pad copy
            xp = jnp.zeros((Mp, Kp), jnp.bfloat16).at[:M, :K].set(xp)

        kernel = _mylinear_kernel_f32out if f32_out else _mylinear_kernel_scratch
        scratch = [] if f32_out else [pltpu.VMEM((tm, tn), jnp.float32)]

        cost = pl.CostEstimate(
            flops=2 * Mp * Np * Kp,
            transcendentals=0,
            bytes_accessed=Mp * Kp * 2 + Kp * Np * 2 + Np * 4 + Mp * Np * out_bytes,
        )

        out_padded = pl.pallas_call(
            kernel,
            out_shape=jax.ShapeDtypeStruct((Mp, Np), out_dtype),
            grid_spec=pltpu.PrefetchScalarGridSpec(
                num_scalar_prefetch=0,
                grid=grid,
                in_specs=[
                    pl.BlockSpec((tm, tk), lambda i, j, k: (i, k)),   # X tile
                    pl.BlockSpec((tk, tn), lambda i, j, k: (k, j)),   # W tile
                    pl.BlockSpec((1, tn), lambda i, j, k: (0, j)),    # bias
                ],
                # Same (i, j) block across k -> output/accumulator stays resident.
                out_specs=pl.BlockSpec((tm, tn), lambda i, j, k: (i, j)),
                scratch_shapes=scratch,
            ),
            compiler_params=pltpu.CompilerParams(
                dimension_semantics=("parallel", "parallel", "arbitrary"),
                vmem_limit_bytes=self._vmem_limit,
            ),
            cost_estimate=cost,
        )(xp, self._w, self._b)

        if (Mp, Np) != (M, self._N):
            return out_padded[:M, :self._N]
        return out_padded


def mylinear_forward(x, weight, bias, *, out_dtype=jnp.bfloat16, **tile_kwargs):
    """One-shot functional form (re-pads W/b each call; prefer MyLinearPallas)."""
    return MyLinearPallas(weight, bias, out_dtype=out_dtype, **tile_kwargs)(x)


def _bf16_ref(x, weight, bias, out_dtype=jnp.bfloat16):
    # Reference with the same bf16-input / f32-accumulate numerics.
    acc = jnp.dot(x.astype(jnp.bfloat16), weight.astype(jnp.bfloat16),
                  preferred_element_type=jnp.float32)
    return jnp.maximum(acc + bias.astype(jnp.float32), 0.0).astype(out_dtype)


if __name__ == "__main__":
    key = jax.random.PRNGKey(0)

    # --- Small shapes matching the original module usage --------------------
    k_x, k_w, k_b = jax.random.split(key, 3)
    batch, in_units, units = 8, 32, 64
    x = jax.random.normal(k_x, (batch, in_units), dtype=jnp.float32)
    weight = jax.random.normal(k_w, (in_units, units), dtype=jnp.float32)
    bias = jax.random.normal(k_b, (units,), dtype=jnp.float32)

    layer = MyLinearPallas(weight, bias)              # bf16 fast-path output
    out = jax.block_until_ready(layer(x))
    assert out.shape == (batch, units) and out.dtype == jnp.bfloat16
    ref = _bf16_ref(x, weight, bias)
    assert jnp.allclose(out.astype(jnp.float32), ref.astype(jnp.float32),
                        atol=2e-2, rtol=2e-2)
    # Loose semantic check against the pure-f32 PyTorch forward.
    # TODO(synk): offer an f32-input matmul path if exact f32 parity is needed.
    ref_f32 = jnp.maximum(x @ weight + bias, 0.0)
    assert jnp.allclose(out.astype(jnp.float32), ref_f32, atol=2e-1, rtol=5e-2)

    # --- Larger shape exercising M/N/K tiling + both kernel variants --------
    k_x2, k_w2, k_b2 = jax.random.split(jax.random.PRNGKey(1), 3)
    M2, K2, N2 = 256, 1024, 512
    x2 = jax.random.normal(k_x2, (M2, K2), dtype=jnp.float32)
    w2 = jax.random.normal(k_w2, (K2, N2), dtype=jnp.float32)
    b2 = jax.random.normal(k_b2, (N2,), dtype=jnp.float32)

    layer2_bf16 = MyLinearPallas(w2, b2)                         # scratch path
    layer2_f32 = MyLinearPallas(w2, b2, out_dtype=jnp.float32,
                                tm=128, tn=256, tk=256)          # (2,2,4) grid
    out2 = jax.block_until_ready(layer2_bf16(x2))
    out2_f32 = jax.block_until_ready(layer2_f32(x2))
    assert out2.shape == (M2, N2) and out2_f32.shape == (M2, N2)
    ref2 = _bf16_ref(x2, w2, b2, out_dtype=jnp.float32)
    assert jnp.allclose(out2.astype(jnp.float32), ref2, atol=5e-1, rtol=2e-2)
    assert jnp.allclose(out2_f32, ref2, atol=1e-2, rtol=1e-2)

    print("KERNEL_OK")
</pallas_src>

<mosaic_0001>
module attributes {stable_mosaic.version = 11 : i64} {
  func.func @_mylinear_kernel_scratch(%arg0: i32, %arg1: i32, %arg2: i32, %arg3: memref<16x128xbf16, #tpu.memory_space<vmem>>, %arg4: memref<128x128xbf16, #tpu.memory_space<vmem>>, %arg5: memref<1x128xf32, #tpu.memory_space<vmem>>, %arg6: memref<16x128xbf16, #tpu.memory_space<vmem>>, %arg7: memref<16x128xf32, #tpu.memory_space<vmem>>) attributes {dimension_semantics = [#tpu.dimension_semantics<parallel>, #tpu.dimension_semantics<parallel>, #tpu.dimension_semantics<arbitrary>], iteration_bounds = array<i64: 1, 1, 1>, scalar_prefetch = 0 : i64, scratch_operands = 1 : i64, tpu.core_type = #tpu.core_type<tc>, window_params = [{transform_indices = @transform_0, window_bounds = array<i64: 16, 128>}, {transform_indices = @transform_1, window_bounds = array<i64: 128, 128>}, {transform_indices = @transform_2, window_bounds = array<i64: 1, 128>}, {transform_indices = @transform_3, window_bounds = array<i64: 16, 128>}]} {
    %c0_i32 = arith.constant 0 : i32
    %0 = arith.cmpi eq, %arg2, %c0_i32 : i32
    %1 = arith.extui %0 : i1 to i32
    %c0_i32_0 = arith.constant 0 : i32
    %2 = arith.cmpi ne, %1, %c0_i32_0 : i32
    scf.if %2 {
      %cst_10 = arith.constant 0.000000e+00 : f32
      %12 = vector.broadcast %cst_10 : f32 to vector<16x128xf32>
      %c0_11 = arith.constant 0 : index
      %c0_12 = arith.constant 0 : index
      %13 = vector.load %arg7[%c0_11, %c0_12] : memref<16x128xf32, #tpu.memory_space<vmem>>, vector<16x128xf32>
      tpu.vector_store %arg7[%c0_11, %c0_12], %12 {strides = array<i32>} : memref<16x128xf32, #tpu.memory_space<vmem>>, vector<16x128xf32>,
    } else {
    }
    %c0 = arith.constant 0 : index
    %c0_1 = arith.constant 0 : index
    %3 = vector.load %arg7[%c0, %c0_1] : memref<16x128xf32, #tpu.memory_space<vmem>>, vector<16x128xf32>
    %c0_2 = arith.constant 0 : index
    %c0_3 = arith.constant 0 : index
    %4 = vector.load %arg3[%c0_2, %c0_3] : memref<16x128xbf16, #tpu.memory_space<vmem>>, vector<16x128xbf16>
    %c0_4 = arith.constant 0 : index
    %c0_5 = arith.constant 0 : index
    %5 = vector.load %arg4[%c0_4, %c0_5] : memref<128x128xbf16, #tpu.memory_space<vmem>>, vector<128x128xbf16>
    %cst = arith.constant dense<0.000000e+00> : vector<16x128xf32>
    %6 = tpu.matmul %4, %5, %cst {dimension_numbers = #tpu.dot_dimension_numbers<[1], [0], [0], [1], [0, 0, 1, 1], [], []>} : vector<16x128xbf16>, vector<128x128xbf16>, vector<16x128xf32> -> vector<16x128xf32>
    %7 = arith.addf %3, %6 : vector<16x128xf32>
    %c0_6 = arith.constant 0 : index
    %c0_7 = arith.constant 0 : index
    %8 = vector.load %arg7[%c0_6, %c0_7] : memref<16x128xf32, #tpu.memory_space<vmem>>, vector<16x128xf32>
    tpu.vector_store %arg7[%c0_6, %c0_7], %7 {strides = array<i32>} : memref<16x128xf32, #tpu.memory_space<vmem>>, vector<16x128xf32>,
    %c0_i32_8 = arith.constant 0 : i32
    %9 = arith.cmpi eq, %arg2, %c0_i32_8 : i32
    %10 = arith.extui %9 : i1 to i32
    %c0_i32_9 = arith.constant 0 : i32
    %11 = arith.cmpi ne, %10, %c0_i32_9 : i32
    scf.if %11 {
      %c0_10 = arith.constant 0 : index
      %c0_11 = arith.constant 0 : index
      %12 = vector.load %arg7[%c0_10, %c0_11] : memref<16x128xf32, #tpu.memory_space<vmem>>, vector<16x128xf32>
      %c0_12 = arith.constant 0 : index
      %c0_13 = arith.constant 0 : index
      %13 = vector.load %arg5[%c0_12, %c0_13] : memref<1x128xf32, #tpu.memory_space<vmem>>, vector<1x128xf32>
      %14 = vector.broadcast %13 : vector<1x128xf32> to vector<16x128xf32>
      %15 = arith.addf %12, %14 : vector<16x128xf32>
      %cst_14 = arith.constant 0.000000e+00 : f32
      %16 = vector.broadcast %cst_14 : f32 to vector<16x128xf32>
      %17 = arith.maximumf %15, %16 : vector<16x128xf32>
      %18 = arith.truncf %17 : vector<16x128xf32> to vector<16x128xbf16>
      %c0_15 = arith.constant 0 : index
      %c0_16 = arith.constant 0 : index
      %19 = vector.load %arg6[%c0_15, %c0_16] : memref<16x128xbf16, #tpu.memory_space<vmem>>, vector<16x128xbf16>
      tpu.vector_store %arg6[%c0_15, %c0_16], %18 {strides = array<i32>} : memref<16x128xbf16, #tpu.memory_space<vmem>>, vector<16x128xbf16>,
    } else {
    }
    return
  }
  func.func @transform_0(%arg0: i32, %arg1: i32, %arg2: i32) -> (i32, i32) {
    %c0_i32 = arith.constant 0 : i32
    return %arg0, %arg2 : i32, i32
  }
  func.func @transform_1(%arg0: i32, %arg1: i32, %arg2: i32) -> (i32, i32) {
    %c0_i32 = arith.constant 0 : i32
    return %arg2, %arg1 : i32, i32
  }
  func.func @transform_2(%arg0: i32, %arg1: i32, %arg2: i32) -> (i32, i32) {
    %c0_i32 = arith.constant 0 : i32
    %c0_i32_0 = arith.constant 0 : i32
    return %c0_i32, %arg1 : i32, i32
  }
  func.func @transform_3(%arg0: i32, %arg1: i32, %arg2: i32) -> (i32, i32) {
    %c0_i32 = arith.constant 0 : i32
    return %arg0, %arg1 : i32, i32
  }
}

</mosaic_0001>

<llo_original>
// kernel: tpu_custom_call.1
$region0: #{tpu_custom_call.1}
  #allocation0 [shape = 'u32[]', space=smem, size = 0x4, offset = 0x4, fixed_abs, tag = 'smem constant byte address 0x4 - core index']
  #allocation1 [shape = 'u32[144,128]{1,0:T(1,128)}', space=vmem, size = 0x12000, scoped, tag = 'internal scratch']
  #allocation2 [shape = 'f32[16,128]{1,0:T(8,128)}', space=vmem, size = 0x2000, scoped, tag = 'scratch operand']
  %s0 = inlined_call_operand.hbm [shape: bf16[16,128], index: 0, kind: input, shape index: {}]
  %s1 = inlined_call_operand.hbm [shape: bf16[128,128], index: 1, kind: input, shape index: {}]
  %s2 = inlined_call_operand.vmem [shape: f32[1,128], index: 2, kind: input, shape index: {}]
  %s3 = inlined_call_operand.hbm [shape: bf16[16,128], index: 3, kind: output, shape index: {}]
  %s4 = sld [smem:[#allocation0]]
  $region38: #{tpu_custom_call.1} parent=0
    _
  %s6 = ssub.s32 1, %s4
  %s7 = scalar_select 0, %s6, %s4
  $region1: #{tpu_custom_call.1} parent=0
    #allocation3 [shape = 'u8[4096]{0}', space=vmem, size = 0x1000, scoped, tag = 'input window, operand 0, single buffered']
    #allocation4 [shape = 's32[1]{0}', space=sflag, size = 0x4, scoped, tag = 'scoped memory for tpu_custom_call.1']
    #allocation5 [shape = 's32[1]{0}', space=sflag, size = 0x4, scoped, tag = 'scoped memory for tpu_custom_call.1']
    #allocation6 [shape = 'u8[32768]{0}', space=vmem, size = 0x8000, scoped, tag = 'input window, operand 1, single buffered']
    #allocation7 [shape = 's32[1]{0}', space=sflag, size = 0x4, scoped, tag = 'scoped memory for tpu_custom_call.1']
    #allocation8 [shape = 'u8[4096]{0}', space=vmem, size = 0x1000, scoped, tag = 'output window, operand 0, single buffered']
    %8 = vsyncpa [#allocation4], 0
    %9 = vsyncpa [#allocation7], 0
    %10 = vsyncpa [#allocation5], 0
    // Predicated region
    $region2: #{tpu_custom_call.1} parent=1 // pred_check
      _
    $region3: #{tpu_custom_call.1} parent=1 // pred_check_branch
      %12 = sbr.rel (0) target = $region5
    $region4: #{tpu_custom_call.1} parent=1 // pred_region
      %s14 = ssub.s32 128, 128
      %15 = vsyncadd [#allocation4], %s14
      %s16 = sshll.u32 [#allocation3], 4
      %s17 = int_to_ptr.vmem [resolvable:$true] %s16
      %22 = dma.hbm_to_vmem [thread:$0]  %s0, 128, %s17, [#allocation4], 64, 64, 4
    $region5: #{tpu_custom_call.1} parent=1 // pred_fallthru
      _
    // Predicated region
    $region6: #{tpu_custom_call.1} parent=1 // pred_check
      _
    $region7: #{tpu_custom_call.1} parent=1 // pred_check_branch
      %24 = sbr.rel (0) target = $region9
    $region8: #{tpu_custom_call.1} parent=1 // pred_region
      %s26 = ssub.s32 1024, 1024
      %27 = vsyncadd [#allocation7], %s26
      %s28 = sshll.u32 [#allocation6], 4
      %s29 = int_to_ptr.vmem [resolvable:$true] %s28
      %34 = dma.hbm_to_vmem [thread:$0]  %s1, 1024, %s29, [#allocation7], 64, 64, 4
    $region9: #{tpu_custom_call.1} parent=1 // pred_fallthru
      _
    // Predicated region
    $region10: #{tpu_custom_call.1} parent=1 // pred_check
      _
    $region11: #{tpu_custom_call.1} parent=1 // pred_check_branch
      %36 = sbr.rel (0) target = $region13
    $region12: #{tpu_custom_call.1} parent=1 // pred_region
      _
    $region13: #{tpu_custom_call.1} parent=1 // pred_fallthru
      _
    // Predicated region
    $region14: #{tpu_custom_call.1} parent=1 // pred_check
      _
    $region15: #{tpu_custom_call.1} parent=1 // pred_check_branch
      %38 = sbr.rel (0) target = $region17
    $region16: #{tpu_custom_call.1} parent=1 // pred_region
      %39 = dma.done [#allocation4], 128
    $region17: #{tpu_custom_call.1} parent=1 // pred_fallthru
      _
    // Predicated region
    $region18: #{tpu_custom_call.1} parent=1 // pred_check
      _
    $region19: #{tpu_custom_call.1} parent=1 // pred_check_branch
      %41 = sbr.rel (0) target = $region21
    $region20: #{tpu_custom_call.1} parent=1 // pred_region
      %42 = dma.done [#allocation7], 1024
    $region21: #{tpu_custom_call.1} parent=1 // pred_fallthru
      _
    %p44 = scmp.eq.s32.totalorder 0, 0
    // Predicated region
    $region22: #{tpu_custom_call.1} parent=1 // pred_check
      %p45 = pneg %p44
    $region23: #{tpu_custom_call.1} parent=1 // pred_check_branch
      %47 = sbr.rel (%p45) target = $region25
    $region24: #{tpu_custom_call.1} parent=1 // pred_region
      %48 = vst [vmem:[#allocation2] sm:$0xff] 0.0
      %49 = vst [vmem:[#allocation2 + $0x8] sm:$0xff] 0.0
    $region25: #{tpu_custom_call.1} parent=1 // pred_fallthru
      _
    %v50 = vld [vmem:[#allocation2] sm:$0xff]
    %v51 = vld [vmem:[#allocation2 + $0x8] sm:$0xff]
    %v52 = vld [vmem:[#allocation3] sm:$0xf]
    %v53 = vld [vmem:[#allocation3 + $0x4] sm:$0xf]
    %v54 = vld [vmem:[#allocation6] sm:$0xf]
    %v55 = vld [vmem:[#allocation6 + $0x4] sm:$0xf]
    %v56 = vld [vmem:[#allocation6 + $0x8] sm:$0xf]
    %v57 = vld [vmem:[#allocation6 + $0xc] sm:$0xf]
    %v58 = vld [vmem:[#allocation6 + $0x10] sm:$0xf]
    %v59 = vld [vmem:[#allocation6 + $0x14] sm:$0xf]
    %v60 = vld [vmem:[#allocation6 + $0x18] sm:$0xf]
    %v61 = vld [vmem:[#allocation6 + $0x1c] sm:$0xf]
    %v62 = vld [vmem:[#allocation6 + $0x20] sm:$0xf]
    %v63 = vld [vmem:[#allocation6 + $0x24] sm:$0xf]
    %v64 = vld [vmem:[#allocation6 + $0x28] sm:$0xf]
    %v65 = vld [vmem:[#allocation6 + $0x2c] sm:$0xf]
    %v66 = vld [vmem:[#allocation6 + $0x30] sm:$0xf]
    %v67 = vld [vmem:[#allocation6 + $0x34] sm:$0xf]
    %v68 = vld [vmem:[#allocation6 + $0x38] sm:$0xf]
    %v69 = vld [vmem:[#allocation6 + $0x3c] sm:$0xf]
    %v72 = vunpack.c.l.b16 %v52
    %v73 = vunpack.c.l.b16 %v53
    %v74 = vpack.c.b16 %v73, %v72
    %v92 = vunpack.c.l.b16 %v54
    %v93 = vunpack.c.l.b16 %v55
    %v94 = vunpack.c.l.b16 %v56
    %v95 = vunpack.c.l.b16 %v57
    %v96 = vunpack.c.l.b16 %v58
    %v97 = vunpack.c.l.b16 %v59
    %v98 = vunpack.c.l.b16 %v60
    %v99 = vunpack.c.l.b16 %v61
    %v100 = vunpack.c.l.b16 %v62
    %v101 = vunpack.c.l.b16 %v63
    %v102 = vunpack.c.l.b16 %v64
    %v103 = vunpack.c.l.b16 %v65
    %v104 = vunpack.c.l.b16 %v66
    %v105 = vunpack.c.l.b16 %v67
    %v106 = vunpack.c.l.b16 %v68
    %v107 = vunpack.c.l.b16 %v69
    %v108 = vpack.c.b16 %v93, %v92
    %v109 = vpack.c.b16 %v95, %v94
    %v110 = vpack.c.b16 %v97, %v96
    %v111 = vpack.c.b16 %v99, %v98
    %v112 = vpack.c.b16 %v101, %v100
    %v113 = vpack.c.b16 %v103, %v102
    %v114 = vpack.c.b16 %v105, %v104
    %v115 = vpack.c.b16 %v107, %v106
    %124 = vmatprep.subr.bf16.mxu0 0
    %125 = vmatpush1.bf16.msra.mxu0 %v115
    %126 = vmatprep.subr.bf16.mxu0 0
    %127 = vmatpush1.bf16.msra.mxu0 %v114
    %128 = vmatprep.subr.bf16.mxu0 0
    %129 = vmatpush1.bf16.msra.mxu0 %v113
    %130 = vmatprep.subr.bf16.mxu0 0
    %131 = vmatpush1.bf16.msra.mxu0 %v112
    %132 = vmatprep.subr.bf16.mxu0 0
    %133 = vmatpush1.bf16.msra.mxu0 %v111
    %134 = vmatprep.subr.bf16.mxu0 0
    %135 = vmatpush1.bf16.msra.mxu0 %v110
    %136 = vmatprep.subr.bf16.mxu0 0
    %137 = vmatpush1.bf16.msra.mxu0 %v109
    %138 = vmatprep.subr.bf16.mxu0 0
    %139 = vmatpush1.bf16.msra.mxu0 %v108
    %140 = vmatprep.subr.bf16.mxu0 0
    %141 = vmatpush2.bf16.msra.mxu0 0
    %142 = vmatprep.subr.bf16.mxu0 0
    %143 = vmatpush2.bf16.msra.mxu0 0
    %144 = vmatprep.subr.bf16.mxu0 0
    %145 = vmatpush2.bf16.msra.mxu0 0
    %146 = vmatprep.subr.bf16.mxu0 0
    %147 = vmatpush2.bf16.msra.mxu0 0
    %148 = vmatprep.subr.bf16.mxu0 0
    %149 = vmatpush2.bf16.msra.mxu0 0
    %150 = vmatprep.subr.bf16.mxu0 0
    %151 = vmatpush2.bf16.msra.mxu0 0
    %152 = vmatprep.subr.bf16.mxu0 0
    %153 = vmatpush2.bf16.msra.mxu0 0
    %154 = vmatprep.subr.bf16.mxu0 0
    %155 = vmatpush2.bf16.msra.mxu0 0
    %156 = vmatprep.mubr.bf16.mxu0 0
    %157 = vmatmul.mubr.bf16.gmra.mxu0 %v74
    %v158 = vpop.f32.mrf.mxu0
    %v159 = vadd.f32 0.0, %v158
    %v160 = vpop.f32.mrf.mxu0
    %v161 = vpop.f32.mrf.mxu0
    %v162 = vadd.f32 0.0, %v161
    %v163 = vpop.f32.mrf.mxu0
    %164 = vdwg.mxu0
    %v165 = vadd.f32 %v50, %v159
    %v166 = vadd.f32 %v51, %v162
    %167 = vst [vmem:[#allocation2] sm:$0xff] %v165
    %168 = vst [vmem:[#allocation2 + $0x8] sm:$0xff] %v166
    // Predicated region
    $region26: #{tpu_custom_call.1} parent=1 // pred_check
      %p169 = pneg %p44
    $region27: #{tpu_custom_call.1} parent=1 // pred_check_branch
      %171 = sbr.rel (%p169) target = $region29
    $region28: #{tpu_custom_call.1} parent=1 // pred_region
      %v172 = vld [vmem:[#allocation2] sm:$0xff]
      %v173 = vld [vmem:[#allocation2 + $0x8] sm:$0xff]
      %v174 = vld [vmem:[%s2] sm:$0x1]
      %v176 = vlaneseq
      %v177 = vshrl.u32 %v176, 7
      %v178 = vsub.s32 0, %v177
      %v179 = vrot.slane %v174, %v178
      %v181 = vadd.f32 %v172, %v179
      %v182 = vadd.f32 %v173, %v179
      %v183 = vmax.f32 %v181, 0.0
      %v184 = vmax.f32 %v182, 0.0
      %v185 = vpack.c.bf16 %v184, %v183
      %v187 = vunpack.c.l.b16 %v185
      %v188 = vunpack.c.h.b16 %v185
      %v189 = vpack.c.b16 %v187, %v187
      %v190 = vpack.c.b16 %v188, %v188
      %193 = vst [vmem:[#allocation8] sm:$0xf] %v189
      %194 = vst [vmem:[#allocation8 + $0x4] sm:$0xf] %v190
    $region29: #{tpu_custom_call.1} parent=1 // pred_fallthru
      _
    // Predicated region
    $region30: #{tpu_custom_call.1} parent=1 // pred_check
      _
    $region31: #{tpu_custom_call.1} parent=1 // pred_check_branch
      %196 = sbr.rel (0) target = $region33
    $region32: #{tpu_custom_call.1} parent=1 // pred_region
      %s198 = ssub.s32 128, 128
      %199 = vsyncadd [#allocation5], %s198
      %s200 = sshll.u32 [#allocation8], 4
      %s201 = int_to_ptr.vmem [resolvable:$true] %s200
      %206 = dma.vmem_to_hbm [thread:$0]  %s201, 128, %s3, [#allocation5], 64, 64, 4
    $region33: #{tpu_custom_call.1} parent=1 // pred_fallthru
      _
    // Predicated region
    $region34: #{tpu_custom_call.1} parent=1 // pred_check
      _
    $region35: #{tpu_custom_call.1} parent=1 // pred_check_branch
      %208 = sbr.rel (0) target = $region37
    $region36: #{tpu_custom_call.1} parent=1 // pred_region
      %209 = dma.done [#allocation5], 128
    $region37: #{tpu_custom_call.1} parent=1 // pred_fallthru
      _
    %210 = vsyncpa [#allocation4], 1
    %211 = vsyncpa [#allocation7], 1
    %212 = vsyncpa [#allocation5], 1

</llo_original>
